<compile_context>
chip_gen: v6e
topology: v6e:2x2x1
jax: 0.10.0
libtpu: 0.0.40
codegen_flags: <defaults>
</compile_context>

<pallas_src>
import math

import jax
import jax.numpy as jnp
from jax.experimental import pallas as pl
from jax.experimental.pallas import tpu as pltpu


def decoder_kernel(t_ref, freqs_ref, x_ref, w_tproj_ref, w_in_ref,
                   w_fc1_ref, w_enc_ref, w_out_ref, b_out_ref,
                   o_ref, enc_ref):
    mid = w_tproj_ref.shape[0]
    half = mid // 2
    num_layers = w_fc1_ref.shape[0]

    # ---- sinusoidal timestep embedding: [sin(t*f) | cos(t*f)] ----
    # freqs_ref is [1, mid] = [base, base]; compute both transcendental streams
    # on the EUP and select per lane (no concat, exact f32 sin/cos).
    t = t_ref[...]                                      # [TB, 1]  f32
    ang = t * freqs_ref[...]                            # [TB, mid]
    lane = jax.lax.broadcasted_iota(jnp.int32, ang.shape, 1)
    t_emb = jnp.where(lane < half, jnp.sin(ang), jnp.cos(ang))

    # ---- t_proj: Linear(mid, mid, bias=False) + ReLU (bf16 MXU, f32 acc) ----
    t_emb = jnp.maximum(
        jnp.dot(t_emb.astype(jnp.bfloat16), w_tproj_ref[...],
                preferred_element_type=jnp.float32),
        0.0,
    )                                                   # [TB, mid] f32
    t_emb_bf = t_emb.astype(jnp.bfloat16)

    # ---- in_fc: Linear(in_features, mid, bias=False) ----
    out = jnp.dot(x_ref[...].astype(jnp.bfloat16), w_in_ref[...],
                  preferred_element_type=jnp.float32)   # [TB, mid] f32

    # ---- loop-invariant enc contributions for all layers in one matmul ----
    # N = L*mid fills the MXU N dimension; result parked in VMEM scratch so it
    # is NOT held live in vregs across the serial residual chain.
    enc_ref[...] = jnp.dot(t_emb_bf, w_enc_ref[...],
                           preferred_element_type=jnp.float32)  # [TB, L*mid]

    # ---- temporal layers: out = out + ReLU(out @ Wfc1 + enc[layer]) ----
    for layer in range(num_layers):                     # static unroll (L small)
        h = jnp.dot(out.astype(jnp.bfloat16), w_fc1_ref[layer],
                    preferred_element_type=jnp.float32)
        h = h + enc_ref[:, layer * mid:(layer + 1) * mid]
        out = out + jnp.maximum(h, 0.0)

    # ---- out_fc: Linear(mid, out_pad) with bias (lane-dense, unmasked store) ----
    o_ref[...] = (jnp.dot(out.astype(jnp.bfloat16), w_out_ref[...],
                          preferred_element_type=jnp.float32)
                  + b_out_ref[...])


def _tensorcores_per_chip():
    """Best-effort detection of v7x-style multi-TensorCore chips."""
    try:
        kind = jax.devices()[0].device_kind.lower()
    except Exception:
        return 1
    return 2 if "v7" in kind else 1


@jax.jit
def decoder_forward(x, t, params):
    """x: [B, in_features] f32, t: [B] f32, params: dict (see init_params)."""
    B, in_features = x.shape
    mid = params["w_tproj"].shape[0]
    L = params["w_fc1"].shape[0]
    out_pad = params["w_out"].shape[1]      # lane-dense padded output width

    # --- batch tiling: balanced tiles (<=256 rows, multiple of 8 sublanes),
    #     bounded padding, and >=2 tiles on v7x so both TensorCores engage. ---
    cdiv = lambda a, b: -(-a // b)
    n_tiles = cdiv(B, 256)
    if n_tiles == 1 and B >= 64 and _tensorcores_per_chip() >= 2:
        n_tiles = 2
    TB = cdiv(cdiv(B, n_tiles), 8) * 8
    B_pad = n_tiles * TB

    t2d = t.astype(jnp.float32).reshape(B, 1)
    if B_pad != B:
        pad = B_pad - B
        x = jnp.pad(x, ((0, pad), (0, 0)))
        t2d = jnp.pad(t2d, ((0, pad), (0, 0)))

    batch_row = lambda i: (i, 0)     # tiled over batch
    const2 = lambda i: (0, 0)        # VMEM-resident (weights / tables)
    const3 = lambda i: (0, 0, 0)

    out = pl.pallas_call(
        decoder_kernel,
        out_shape=jax.ShapeDtypeStruct((B_pad, out_pad), jnp.float32),
        grid=(n_tiles,),
        in_specs=[
            pl.BlockSpec((TB, 1), batch_row),              # t2d
            pl.BlockSpec((1, mid), const2),                # freqs_full
            pl.BlockSpec((TB, in_features), batch_row),    # x
            pl.BlockSpec((mid, mid), const2),              # w_tproj
            pl.BlockSpec((in_features, mid), const2),      # w_in
            pl.BlockSpec((L, mid, mid), const3),           # w_fc1 (stacked)
            pl.BlockSpec((mid, L * mid), const2),          # w_enc_flat
            pl.BlockSpec((mid, out_pad), const2),          # w_out (lane-padded)
            pl.BlockSpec((1, out_pad), const2),            # b_out (lane-padded)
        ],
        out_specs=pl.BlockSpec((TB, out_pad), batch_row),
        scratch_shapes=[pltpu.VMEM((TB, L * mid), jnp.float32)],  # enc_all
        compiler_params=pltpu.CompilerParams(
            dimension_semantics=("parallel",),
            vmem_limit_bytes=32 * 1024 * 1024),
    )(t2d, params["freqs_full"], x,
      params["w_tproj"], params["w_in"], params["w_fc1"],
      params["w_enc_flat"], params["w_out"], params["b_out"])

    return out[:B, :in_features]


def init_params(key, in_features, mid_features, num_layers):
    """PyTorch-Linear-like init (uniform +/- 1/sqrt(fan_in)).
    Weights stored pre-transposed [in, out] in bfloat16; out_fc weight/bias are
    zero-padded to a 128-lane-dense output width; sinusoidal freq table f32."""
    assert mid_features % 2 == 0, "mid_features must be even for sin/cos embedding"
    keys = jax.random.split(key, 6)

    def lin(k, fan_in, fan_out):
        bound = 1.0 / math.sqrt(fan_in)
        w = jax.random.uniform(k, (fan_in, fan_out), jnp.float32, -bound, bound)
        return w.astype(jnp.bfloat16)

    w_enc_stack = jnp.stack([
        lin(k, mid_features, mid_features)
        for k in jax.random.split(keys[3], num_layers)])          # [L, mid, mid]
    # Flatten to [mid, L*mid]: columns layer*mid:(layer+1)*mid == w_enc[layer].
    w_enc_flat = jnp.transpose(w_enc_stack, (1, 0, 2)).reshape(
        mid_features, num_layers * mid_features)

    # Sinusoidal frequency table, lane-dense [1, mid] = [base, base].
    half = mid_features // 2
    scale = math.log(10000.0) / (half - 1)
    base = jnp.exp(-jnp.arange(half, dtype=jnp.float32) * scale)
    freqs_full = jnp.concatenate([base, base])[None, :]

    # out_fc padded to a lane-dense output width (multiple of 128).
    out_pad = max(128, -(-in_features // 128) * 128)
    bound_out = 1.0 / math.sqrt(mid_features)
    w_out = lin(keys[4], mid_features, in_features)
    w_out = jnp.pad(w_out, ((0, 0), (0, out_pad - in_features)))
    b_out = jax.random.uniform(
        keys[5], (1, in_features), jnp.float32, -bound_out, bound_out)
    b_out = jnp.pad(b_out, ((0, 0), (0, out_pad - in_features)))

    return {
        "w_in": lin(keys[0], in_features, mid_features),
        "w_tproj": lin(keys[1], mid_features, mid_features),
        "w_fc1": jnp.stack([
            lin(k, mid_features, mid_features)
            for k in jax.random.split(keys[2], num_layers)]),
        "w_enc_flat": w_enc_flat,
        "w_out": w_out,          # [mid, out_pad] bf16 (zero-padded columns)
        "b_out": b_out,          # [1, out_pad] f32 (zero-padded)
        "freqs_full": freqs_full,
    }


def decoder_reference(x, t, params):
    """Pure-JAX reference of the PyTorch forward (bf16-stored weights, f32 math)."""
    in_features = x.shape[1]
    mid = params["w_tproj"].shape[0]
    L = params["w_fc1"].shape[0]
    half = mid // 2
    scale = math.log(10000.0) / (half - 1)
    freqs = jnp.exp(-jnp.arange(half, dtype=jnp.float32) * scale)
    ang = t.astype(jnp.float32)[:, None] * freqs[None, :]
    t_emb = jnp.concatenate([jnp.sin(ang), jnp.cos(ang)], axis=-1)

    w_tproj = params["w_tproj"].astype(jnp.float32)
    w_in = params["w_in"].astype(jnp.float32)
    w_fc1 = params["w_fc1"].astype(jnp.float32)
    w_enc = params["w_enc_flat"].astype(jnp.float32)
    w_out = params["w_out"].astype(jnp.float32)[:, :in_features]
    b_out = params["b_out"][:, :in_features]

    t_emb = jnp.maximum(t_emb @ w_tproj, 0.0)
    out = x @ w_in
    for layer in range(L):
        h = out @ w_fc1[layer] + t_emb @ w_enc[:, layer * mid:(layer + 1) * mid]
        out = out + jnp.maximum(h, 0.0)
    return out @ w_out + b_out


if __name__ == "__main__":
    # Small shapes consistent with the module's forward:
    #   x: [B, in_features], t: [B] (one timestep per batch element)
    B = 8
    IN_FEATURES = 32
    MID_FEATURES = 128
    NUM_TEMPORAL_LAYERS = 2

    key = jax.random.PRNGKey(0)
    k_x, k_t, k_p = jax.random.split(key, 3)

    x = jax.random.normal(k_x, (B, IN_FEATURES), jnp.float32)
    t = jax.random.randint(k_t, (B,), 0, 1000).astype(jnp.float32)
    params = init_params(k_p, IN_FEATURES, MID_FEATURES, NUM_TEMPORAL_LAYERS)

    out = decoder_forward(x, t, params)
    out = jax.block_until_ready(out)

    ref = decoder_reference(x, t, params)
    assert out.shape == (B, IN_FEATURES)
    # bf16 weights / bf16 MXU inputs with f32 accumulation -> relaxed tolerance.
    assert jnp.allclose(out, ref, atol=3e-2, rtol=3e-2), "mismatch vs reference"

    print("KERNEL_OK")
</pallas_src>

<mosaic_0001>
module attributes {stable_mosaic.version = 11 : i64} {
  func.func @decoder_kernel(%arg0: i32, %arg1: memref<8x1xf32, #tpu.memory_space<vmem>>, %arg2: memref<1x128xf32, #tpu.memory_space<vmem>>, %arg3: memref<8x32xf32, #tpu.memory_space<vmem>>, %arg4: memref<128x128xbf16, #tpu.memory_space<vmem>>, %arg5: memref<32x128xbf16, #tpu.memory_space<vmem>>, %arg6: memref<2x128x128xbf16, #tpu.memory_space<vmem>>, %arg7: memref<128x256xbf16, #tpu.memory_space<vmem>>, %arg8: memref<128x128xbf16, #tpu.memory_space<vmem>>, %arg9: memref<1x128xf32, #tpu.memory_space<vmem>>, %arg10: memref<8x128xf32, #tpu.memory_space<vmem>>, %arg11: memref<8x256xf32, #tpu.memory_space<vmem>>) attributes {dimension_semantics = [#tpu.dimension_semantics<parallel>], iteration_bounds = array<i64: 1>, scalar_prefetch = 0 : i64, scratch_operands = 1 : i64, tpu.core_type = #tpu.core_type<tc>, window_params = [{transform_indices = @transform_0, window_bounds = array<i64: 8, 1>}, {pipeline_mode = #tpu.pipeline_mode<synchronous>, transform_indices = @transform_1, window_bounds = array<i64: 1, 128>}, {transform_indices = @transform_2, window_bounds = array<i64: 8, 32>}, {pipeline_mode = #tpu.pipeline_mode<synchronous>, transform_indices = @transform_3, window_bounds = array<i64: 128, 128>}, {pipeline_mode = #tpu.pipeline_mode<synchronous>, transform_indices = @transform_4, window_bounds = array<i64: 32, 128>}, {pipeline_mode = #tpu.pipeline_mode<synchronous>, transform_indices = @transform_5, window_bounds = array<i64: 2, 128, 128>}, {pipeline_mode = #tpu.pipeline_mode<synchronous>, transform_indices = @transform_6, window_bounds = array<i64: 128, 256>}, {pipeline_mode = #tpu.pipeline_mode<synchronous>, transform_indices = @transform_7, window_bounds = array<i64: 128, 128>}, {pipeline_mode = #tpu.pipeline_mode<synchronous>, transform_indices = @transform_8, window_bounds = array<i64: 1, 128>}, {transform_indices = @transform_9, window_bounds = array<i64: 8, 128>}]} {
    %c0 = arith.constant 0 : index
    %c0_0 = arith.constant 0 : index
    %0 = vector.load %arg1[%c0, %c0_0] : memref<8x1xf32, #tpu.memory_space<vmem>>, vector<8x1xf32>
    %c0_1 = arith.constant 0 : index
    %c0_2 = arith.constant 0 : index
    %1 = vector.load %arg2[%c0_1, %c0_2] : memref<1x128xf32, #tpu.memory_space<vmem>>, vector<1x128xf32>
    %2 = vector.broadcast %0 : vector<8x1xf32> to vector<8x128xf32>
    %3 = vector.broadcast %1 : vector<1x128xf32> to vector<8x128xf32>
    %4 = arith.mulf %2, %3 : vector<8x128xf32>
    %5 = tpu.iota {dimensions = array<i32: 1>} : vector<8x128xi32>
    %c64_i32 = arith.constant 64 : i32
    %6 = vector.broadcast %c64_i32 : i32 to vector<8x128xi32>
    %7 = arith.cmpi slt, %5, %6 : vector<8x128xi32>
    %8 = math.sin %4 : vector<8x128xf32>
    %9 = math.cos %4 : vector<8x128xf32>
    %10 = arith.select %7, %8, %9 : vector<8x128xi1>, vector<8x128xf32>
    %11 = arith.truncf %10 : vector<8x128xf32> to vector<8x128xbf16>
    %c0_3 = arith.constant 0 : index
    %c0_4 = arith.constant 0 : index
    %12 = vector.load %arg4[%c0_3, %c0_4] : memref<128x128xbf16, #tpu.memory_space<vmem>>, vector<128x128xbf16>
    %cst = arith.constant dense<0.000000e+00> : vector<8x128xf32>
    %13 = tpu.matmul %11, %12, %cst {dimension_numbers = #tpu.dot_dimension_numbers<[1], [0], [0], [1], [0, 0, 1, 1], [], []>} : vector<8x128xbf16>, vector<128x128xbf16>, vector<8x128xf32> -> vector<8x128xf32>
    %cst_5 = arith.constant 0.000000e+00 : f32
    %14 = vector.broadcast %cst_5 : f32 to vector<8x128xf32>
    %15 = arith.maximumf %13, %14 : vector<8x128xf32>
    %16 = arith.truncf %15 : vector<8x128xf32> to vector<8x128xbf16>
    %c0_6 = arith.constant 0 : index
    %c0_7 = arith.constant 0 : index
    %17 = vector.load %arg3[%c0_6, %c0_7] : memref<8x32xf32, #tpu.memory_space<vmem>>, vector<8x32xf32>
    %18 = arith.truncf %17 : vector<8x32xf32> to vector<8x32xbf16>
    %c0_8 = arith.constant 0 : index
    %c0_9 = arith.constant 0 : index
    %19 = vector.load %arg5[%c0_8, %c0_9] : memref<32x128xbf16, #tpu.memory_space<vmem>>, vector<32x128xbf16>
    %cst_10 = arith.constant dense<0.000000e+00> : vector<8x128xf32>
    %20 = tpu.matmul %18, %19, %cst_10 {dimension_numbers = #tpu.dot_dimension_numbers<[1], [0], [0], [1], [0, 0, 1, 1], [], []>} : vector<8x32xbf16>, vector<32x128xbf16>, vector<8x128xf32> -> vector<8x128xf32>
    %c0_11 = arith.constant 0 : index
    %c0_12 = arith.constant 0 : index
    %21 = vector.load %arg7[%c0_11, %c0_12] : memref<128x256xbf16, #tpu.memory_space<vmem>>, vector<128x256xbf16>
    %cst_13 = arith.constant dense<0.000000e+00> : vector<8x256xf32>
    %22 = tpu.matmul %16, %21, %cst_13 {dimension_numbers = #tpu.dot_dimension_numbers<[1], [0], [0], [1], [0, 0, 1, 1], [], []>} : vector<8x128xbf16>, vector<128x256xbf16>, vector<8x256xf32> -> vector<8x256xf32>
    %c0_14 = arith.constant 0 : index
    %c0_15 = arith.constant 0 : index
    %23 = vector.load %arg11[%c0_14, %c0_15] : memref<8x256xf32, #tpu.memory_space<vmem>>, vector<8x256xf32>
    tpu.vector_store %arg11[%c0_14, %c0_15], %22 {strides = array<i32>} : memref<8x256xf32, #tpu.memory_space<vmem>>, vector<8x256xf32>,
    %24 = arith.truncf %20 : vector<8x128xf32> to vector<8x128xbf16>
    %c0_16 = arith.constant 0 : index
    %c0_17 = arith.constant 0 : index
    %c0_18 = arith.constant 0 : index
    %25 = vector.load %arg6[%c0_16, %c0_17, %c0_18] : memref<2x128x128xbf16, #tpu.memory_space<vmem>>, vector<1x128x128xbf16>
    %26 = vector.shape_cast %25 : vector<1x128x128xbf16> to vector<128x128xbf16>
    %cst_19 = arith.constant dense<0.000000e+00> : vector<8x128xf32>
    %27 = tpu.matmul %24, %26, %cst_19 {dimension_numbers = #tpu.dot_dimension_numbers<[1], [0], [0], [1], [0, 0, 1, 1], [], []>} : vector<8x128xbf16>, vector<128x128xbf16>, vector<8x128xf32> -> vector<8x128xf32>
    %c0_20 = arith.constant 0 : index
    %c0_21 = arith.constant 0 : index
    %28 = vector.load %arg11[%c0_20, %c0_21] : memref<8x256xf32, #tpu.memory_space<vmem>>, vector<8x128xf32>
    %29 = arith.addf %27, %28 : vector<8x128xf32>
    %cst_22 = arith.constant 0.000000e+00 : f32
    %30 = vector.broadcast %cst_22 : f32 to vector<8x128xf32>
    %31 = arith.maximumf %29, %30 : vector<8x128xf32>
    %32 = arith.addf %20, %31 : vector<8x128xf32>
    %33 = arith.truncf %32 : vector<8x128xf32> to vector<8x128xbf16>
    %c1 = arith.constant 1 : index
    %c0_23 = arith.constant 0 : index
    %c0_24 = arith.constant 0 : index
    %34 = vector.load %arg6[%c1, %c0_23, %c0_24] : memref<2x128x128xbf16, #tpu.memory_space<vmem>>, vector<1x128x128xbf16>
    %35 = vector.shape_cast %34 : vector<1x128x128xbf16> to vector<128x128xbf16>
    %cst_25 = arith.constant dense<0.000000e+00> : vector<8x128xf32>
    %36 = tpu.matmul %33, %35, %cst_25 {dimension_numbers = #tpu.dot_dimension_numbers<[1], [0], [0], [1], [0, 0, 1, 1], [], []>} : vector<8x128xbf16>, vector<128x128xbf16>, vector<8x128xf32> -> vector<8x128xf32>
    %c0_26 = arith.constant 0 : index
    %c128 = arith.constant 128 : index
    %37 = vector.load %arg11[%c0_26, %c128] : memref<8x256xf32, #tpu.memory_space<vmem>>, vector<8x128xf32>
    %38 = arith.addf %36, %37 : vector<8x128xf32>
    %cst_27 = arith.constant 0.000000e+00 : f32
    %39 = vector.broadcast %cst_27 : f32 to vector<8x128xf32>
    %40 = arith.maximumf %38, %39 : vector<8x128xf32>
    %41 = arith.addf %32, %40 : vector<8x128xf32>
    %42 = arith.truncf %41 : vector<8x128xf32> to vector<8x128xbf16>
    %c0_28 = arith.constant 0 : index
    %c0_29 = arith.constant 0 : index
    %43 = vector.load %arg8[%c0_28, %c0_29] : memref<128x128xbf16, #tpu.memory_space<vmem>>, vector<128x128xbf16>
    %cst_30 = arith.constant dense<0.000000e+00> : vector<8x128xf32>
    %44 = tpu.matmul %42, %43, %cst_30 {dimension_numbers = #tpu.dot_dimension_numbers<[1], [0], [0], [1], [0, 0, 1, 1], [], []>} : vector<8x128xbf16>, vector<128x128xbf16>, vector<8x128xf32> -> vector<8x128xf32>
    %c0_31 = arith.constant 0 : index
    %c0_32 = arith.constant 0 : index
    %45 = vector.load %arg9[%c0_31, %c0_32] : memref<1x128xf32, #tpu.memory_space<vmem>>, vector<1x128xf32>
    %46 = vector.broadcast %45 : vector<1x128xf32> to vector<8x128xf32>
    %47 = arith.addf %44, %46 : vector<8x128xf32>
    %c0_33 = arith.constant 0 : index
    %c0_34 = arith.constant 0 : index
    %48 = vector.load %arg10[%c0_33, %c0_34] : memref<8x128xf32, #tpu.memory_space<vmem>>, vector<8x128xf32>
    tpu.vector_store %arg10[%c0_33, %c0_34], %47 {strides = array<i32>} : memref<8x128xf32, #tpu.memory_space<vmem>>, vector<8x128xf32>,
    return
  }
  func.func @transform_0(%arg0: i32) -> (i32, i32) {
    %c0_i32 = arith.constant 0 : i32
    %c0_i32_0 = arith.constant 0 : i32
    return %arg0, %c0_i32 : i32, i32
  }
  func.func @transform_1(%arg0: i32) -> (i32, i32) {
    %c0_i32 = arith.constant 0 : i32
    %c0_i32_0 = arith.constant 0 : i32
    %c0_i32_1 = arith.constant 0 : i32
    return %c0_i32, %c0_i32_0 : i32, i32
  }
  func.func @transform_2(%arg0: i32) -> (i32, i32) {
    %c0_i32 = arith.constant 0 : i32
    %c0_i32_0 = arith.constant 0 : i32
    return %arg0, %c0_i32 : i32, i32
  }
  func.func @transform_3(%arg0: i32) -> (i32, i32) {
    %c0_i32 = arith.constant 0 : i32
    %c0_i32_0 = arith.constant 0 : i32
    %c0_i32_1 = arith.constant 0 : i32
    return %c0_i32, %c0_i32_0 : i32, i32
  }
  func.func @transform_4(%arg0: i32) -> (i32, i32) {
    %c0_i32 = arith.constant 0 : i32
    %c0_i32_0 = arith.constant 0 : i32
    %c0_i32_1 = arith.constant 0 : i32
    return %c0_i32, %c0_i32_0 : i32, i32
  }
  func.func @transform_5(%arg0: i32) -> (i32, i32, i32) {
    %c0_i32 = arith.constant 0 : i32
    %c0_i32_0 = arith.constant 0 : i32
    %c0_i32_1 = arith.constant 0 : i32
    %c0_i32_2 = arith.constant 0 : i32
    return %c0_i32, %c0_i32_0, %c0_i32_1 : i32, i32, i32
  }
  func.func @transform_6(%arg0: i32) -> (i32, i32) {
    %c0_i32 = arith.constant 0 : i32
    %c0_i32_0 = arith.constant 0 : i32
    %c0_i32_1 = arith.constant 0 : i32
    return %c0_i32, %c0_i32_0 : i32, i32
  }
  func.func @transform_7(%arg0: i32) -> (i32, i32) {
    %c0_i32 = arith.constant 0 : i32
    %c0_i32_0 = arith.constant 0 : i32
    %c0_i32_1 = arith.constant 0 : i32
    return %c0_i32, %c0_i32_0 : i32, i32
  }
  func.func @transform_8(%arg0: i32) -> (i32, i32) {
    %c0_i32 = arith.constant 0 : i32
    %c0_i32_0 = arith.constant 0 : i32
    %c0_i32_1 = arith.constant 0 : i32
    return %c0_i32, %c0_i32_0 : i32, i32
  }
  func.func @transform_9(%arg0: i32) -> (i32, i32) {
    %c0_i32 = arith.constant 0 : i32
    %c0_i32_0 = arith.constant 0 : i32
    return %arg0, %c0_i32 : i32, i32
  }
}

</mosaic_0001>

<llo_original>
// kernel: decoder_forward.1
$region0: #{decoder_forward.1}
  #allocation0 [shape = 'u32[]', space=smem, size = 0x4, offset = 0x4, fixed_abs, tag = 'smem constant byte address 0x4 - core index']
  #allocation1 [shape = 'u32[144,128]{1,0:T(1,128)}', space=vmem, size = 0x12000, scoped, tag = 'internal scratch']
  #allocation2 [shape = 'f32[8,256]{1,0:T(8,128)}', space=vmem, size = 0x2000, scoped, tag = 'scratch operand']
  %s0 = inlined_call_operand.vmem [shape: f32[8,1], index: 0, kind: input, shape index: {}]
  %s1 = inlined_call_operand.vmem [shape: f32[1,128], index: 1, kind: input, shape index: {}]
  %s2 = inlined_call_operand.hbm [shape: f32[8,32], index: 2, kind: input, shape index: {}]
  %s3 = inlined_call_operand.hbm [shape: bf16[128,128], index: 3, kind: input, shape index: {}]
  %s4 = inlined_call_operand.vmem [shape: bf16[32,128], index: 4, kind: input, shape index: {}]
  %s5 = inlined_call_operand.hbm [shape: bf16[2,128,128], index: 5, kind: input, shape index: {}]
  %s6 = inlined_call_operand.hbm [shape: bf16[128,256], index: 6, kind: input, shape index: {}]
  %s7 = inlined_call_operand.hbm [shape: bf16[128,128], index: 7, kind: input, shape index: {}]
  %s8 = inlined_call_operand.vmem [shape: f32[1,128], index: 8, kind: input, shape index: {}]
  %s9 = inlined_call_operand.hbm [shape: f32[8,128], index: 9, kind: output, shape index: {}]
  %s10 = sld [smem:[#allocation0]]
  $region66: #{decoder_forward.1} parent=0
    _
  %s12 = ssub.s32 1, %s10
  %s13 = scalar_select 0, %s12, %s10
  $region1: #{decoder_forward.1} parent=0
    #allocation3 [shape = 'u8[4096]{0}', space=vmem, size = 0x1000, scoped, tag = 'input window, operand 2, single buffered']
    #allocation4 [shape = 's32[1]{0}', space=sflag, size = 0x4, scoped, tag = 'scoped memory for decoder_forward.1']
    #allocation5 [shape = 's32[1]{0}', space=sflag, size = 0x4, scoped, tag = 'scoped memory for decoder_forward.1']
    #allocation6 [shape = 'u8[32768]{0}', space=vmem, size = 0x8000, scoped, tag = 'input window, operand 3, single buffered']
    #allocation7 [shape = 's32[1]{0}', space=sflag, size = 0x4, scoped, tag = 'scoped memory for decoder_forward.1']
    #allocation8 [shape = 'u8[65536]{0}', space=vmem, size = 0x10000, scoped, tag = 'input window, operand 5, single buffered']
    #allocation9 [shape = 'u8[65536]{0}', space=vmem, size = 0x10000, scoped, tag = 'input window, operand 6, single buffered']
    #allocation10 [shape = 's32[1]{0}', space=sflag, size = 0x4, scoped, tag = 'scoped memory for decoder_forward.1']
    #allocation11 [shape = 'u8[32768]{0}', space=vmem, size = 0x8000, scoped, tag = 'input window, operand 7, single buffered']
    #allocation12 [shape = 'u8[4096]{0}', space=vmem, size = 0x1000, scoped, tag = 'output window, operand 0, single buffered']
    %14 = vsyncpa [#allocation4], 0
    %15 = vsyncpa [#allocation7], 0
    %16 = vsyncpa [#allocation10], 0
    %17 = vsyncpa [#allocation5], 0
    // Predicated region
    $region2: #{decoder_forward.1} parent=1 // pred_check
      _
    $region3: #{decoder_forward.1} parent=1 // pred_check_branch
      %19 = sbr.rel (0) target = $region5
    $region4: #{decoder_forward.1} parent=1 // pred_region
      _
    $region5: #{decoder_forward.1} parent=1 // pred_fallthru
      _
    // Predicated region
    $region6: #{decoder_forward.1} parent=1 // pred_check
      _
    $region7: #{decoder_forward.1} parent=1 // pred_check_branch
      %21 = sbr.rel (0) target = $region9
    $region8: #{decoder_forward.1} parent=1 // pred_region
      _
    $region9: #{decoder_forward.1} parent=1 // pred_fallthru
      _
    // Predicated region
    $region10: #{decoder_forward.1} parent=1 // pred_check
      _
    $region11: #{decoder_forward.1} parent=1 // pred_check_branch
      %23 = sbr.rel (0) target = $region13
    $region12: #{decoder_forward.1} parent=1 // pred_region
      %s25 = ssub.s32 128, 128
      %26 = vsyncadd [#allocation4], %s25
      %s28 = sshll.u32 [#allocation3], 4
      %s29 = int_to_ptr.vmem [resolvable:$true] %s28
      %31 = dma.hbm_to_vmem [thread:$0]  %s2, 128, %s29, [#allocation4]
    $region13: #{decoder_forward.1} parent=1 // pred_fallthru
      _
    // Predicated region
    $region14: #{decoder_forward.1} parent=1 // pred_check
      _
    $region15: #{decoder_forward.1} parent=1 // pred_check_branch
      %33 = sbr.rel (0) target = $region17
    $region16: #{decoder_forward.1} parent=1 // pred_region
      %s35 = ssub.s32 1024, 1024
      %36 = vsyncadd [#allocation7], %s35
      %s37 = sshll.u32 [#allocation6], 4
      %s38 = int_to_ptr.vmem [resolvable:$true] %s37
      %43 = dma.hbm_to_vmem [thread:$0]  %s3, 1024, %s38, [#allocation7], 64, 64, 4
    $region17: #{decoder_forward.1} parent=1 // pred_fallthru
      _
    // Predicated region
    $region18: #{decoder_forward.1} parent=1 // pred_check
      _
    $region19: #{decoder_forward.1} parent=1 // pred_check_branch
      %45 = sbr.rel (0) target = $region21
    $region20: #{decoder_forward.1} parent=1 // pred_region
      _
    $region21: #{decoder_forward.1} parent=1 // pred_fallthru
      _
    // Predicated region
    $region22: #{decoder_forward.1} parent=1 // pred_check
      _
    $region23: #{decoder_forward.1} parent=1 // pred_check_branch
      %47 = sbr.rel (0) target = $region25
    $region24: #{decoder_forward.1} parent=1 // pred_region
      %s49 = ssub.s32 2048, 2048
      %50 = vsyncadd [#allocation7], %s49
      %s51 = sshll.u32 [#allocation8], 4
      %s52 = int_to_ptr.vmem [resolvable:$true] %s51
      %57 = dma.hbm_to_vmem [thread:$0]  %s5, 2048, %s52, [#allocation7], 64, 64, 4
    $region25: #{decoder_forward.1} parent=1 // pred_fallthru
      _
    // Predicated region
    $region26: #{decoder_forward.1} parent=1 // pred_check
      _
    $region27: #{decoder_forward.1} parent=1 // pred_check_branch
      %59 = sbr.rel (0) target = $region29
    $region28: #{decoder_forward.1} parent=1 // pred_region
      %s61 = ssub.s32 2048, 2048
      %62 = vsyncadd [#allocation10], %s61
      %s63 = sshll.u32 [#allocation9], 4
      %s64 = int_to_ptr.vmem [resolvable:$true] %s63
      %69 = dma.hbm_to_vmem [thread:$0]  %s6, 2048, %s64, [#allocation10], 128, 128, 8
    $region29: #{decoder_forward.1} parent=1 // pred_fallthru
      _
    // Predicated region
    $region30: #{decoder_forward.1} parent=1 // pred_check
      _
    $region31: #{decoder_forward.1} parent=1 // pred_check_branch
      %71 = sbr.rel (0) target = $region33
    $region32: #{decoder_forward.1} parent=1 // pred_region
      %s73 = ssub.s32 1024, 1024
      %74 = vsyncadd [#allocation10], %s73
      %s75 = sshll.u32 [#allocation11], 4
      %s76 = int_to_ptr.vmem [resolvable:$true] %s75
      %81 = dma.hbm_to_vmem [thread:$0]  %s7, 1024, %s76, [#allocation10], 64, 64, 4
    $region33: #{decoder_forward.1} parent=1 // pred_fallthru
      _
    // Predicated region
    $region34: #{decoder_forward.1} parent=1 // pred_check
      _
    $region35: #{decoder_forward.1} parent=1 // pred_check_branch
      %83 = sbr.rel (0) target = $region37
    $region36: #{decoder_forward.1} parent=1 // pred_region
      _
    $region37: #{decoder_forward.1} parent=1 // pred_fallthru
      _
    // Predicated region
    $region38: #{decoder_forward.1} parent=1 // pred_check
      _
    $region39: #{decoder_forward.1} parent=1 // pred_check_branch
      %85 = sbr.rel (0) target = $region41
    $region40: #{decoder_forward.1} parent=1 // pred_region
      %86 = dma.done [#allocation4], 128
    $region41: #{decoder_forward.1} parent=1 // pred_fallthru
      _
    // Predicated region
    $region42: #{decoder_forward.1} parent=1 // pred_check
      _
    $region43: #{decoder_forward.1} parent=1 // pred_check_branch
      %88 = sbr.rel (0) target = $region45
    $region44: #{decoder_forward.1} parent=1 // pred_region
      %89 = dma.done [#allocation7], 1024
    $region45: #{decoder_forward.1} parent=1 // pred_fallthru
      _
    // Predicated region
    $region46: #{decoder_forward.1} parent=1 // pred_check
      _
    $region47: #{decoder_forward.1} parent=1 // pred_check_branch
      %91 = sbr.rel (0) target = $region49
    $region48: #{decoder_forward.1} parent=1 // pred_region
      %92 = dma.done [#allocation7], 2048
    $region49: #{decoder_forward.1} parent=1 // pred_fallthru
      _
    // Predicated region
    $region50: #{decoder_forward.1} parent=1 // pred_check
      _
    $region51: #{decoder_forward.1} parent=1 // pred_check_branch
      %94 = sbr.rel (0) target = $region53
    $region52: #{decoder_forward.1} parent=1 // pred_region
      %95 = dma.done [#allocation10], 2048
    $region53: #{decoder_forward.1} parent=1 // pred_fallthru
      _
    // Predicated region
    $region54: #{decoder_forward.1} parent=1 // pred_check
      _
    $region55: #{decoder_forward.1} parent=1 // pred_check_branch
      %97 = sbr.rel (0) target = $region57
    $region56: #{decoder_forward.1} parent=1 // pred_region
      %98 = dma.done [#allocation10], 1024
    $region57: #{decoder_forward.1} parent=1 // pred_fallthru
      _
    %v100 = vld [vmem:[%s0] sm:$0xff]
    %v101 = vld [vmem:[%s1] sm:$0x1]
    %103 = vset.pattern.permute.xlu0 0
    %104 = vperm.xlu0 %103, %v100
    %v105 = vpop.permute.xlu0 %104
    %v108 = vlaneseq
    %v109 = vshrl.u32 %v108, 7
    %v110 = vsub.s32 0, %v109
    %v111 = vrot.slane %v101, %v110
    %v113 = vmul.f32 %v105, %v111
    %v114 = vlaneseq
    %v115 = vand.u32 %v114, 127
    %vm116 = vcmp.lt.s32.totalorder %v115, 64
    %v117 = vand.u32 2147483647, %v113
    %vm118 = vcmp.le.f32.partialorder %v117, 0.7853982
    %vm119 = vcmp.lt.s32.totalorder %v113, 0
    %v120 = vand.u32 %v113, 2139095040
    %v121 = vshrl.u32 %v120, 23
    %v122 = vsub.s32 %v121, 127
    %v123 = vand.u32 2147483647, %v113
    %v124 = vand.u32 %v123, 8388607
    %v125 = vor.u32 %v124, 8388608
    %v126 = vsub.s32 0, %v125
    %v127 = vadd.s32 %v122, 1
    %vm128 = vcmp.gt.s32.totalorder %v127, 0
    %v129 = vsel %vm128, %v127, 0
    %v130 = vshrl.u32 %v129, 5
    %v131 = vand.u32 %v129, 31
    %v132 = vsub.s32 32, %v131
    %v133 = vshrl.u32 683565275, %v132
    %v134 = vshll.u32 683565275, %v131
    %v135 = vshrl.u32 2475754826, %v132
    %v136 = vor.u32 %v134, %v135
    %v137 = vshll.u32 2475754826, %v131
    %v138 = vshrl.u32 2131351028, %v132
    %v139 = vor.u32 %v137, %v138
    %v140 = vshll.u32 2131351028, %v131
    %v141 = vshrl.u32 2102212464, %v132
    %v142 = vor.u32 %v140, %v141
    %v143 = vshll.u32 2102212464, %v131
    %v144 = vshrl.u32 920167782, %v132
    %v145 = vor.u32 %v143, %v144
    %v146 = vshll.u32 920167782, %v131
    %v147 = vshrl.u32 1326507024, %v132
    %v148 = vor.u32 %v146, %v147
    %vm149 = vcmp.lt.s32.totalorder %v130, 1
    %vm150 = vcmp.lt.s32.totalorder %v130, 2
    %vm151 = vcmp.lt.s32.totalorder %v130, 3
    %vm152 = vcmp.lt.s32.totalorder %v130, 4
    %v153 = vsel %vm149, %v133, %v136
    %v154 = vsel %vm152, %v142, 2102212464
    %v155 = vsel %vm151, %v139, %v154
    %v156 = vsel %vm150, %v153, %v155
    %v157 = vsel %vm149, %v136, %v139
    %v158 = vsel %vm152, %v145, 920167782
    %v159 = vsel %vm151, %v142, %v158
    %v160 = vsel %vm150, %v157, %v159
    %v161 = vsel %vm149, %v139, %v142
    %v162 = vsel %vm152, %v148, 1326507024
    %v163 = vsel %vm151, %v145, %v162
    %v164 = vsel %vm150, %v161, %v163
    %v165 = vshll.u32 %v125, 8
    %v166 = vmul.u32.u64.compose %v165, %v164
    %v167 = vextract.low.u32 %v166
    %v168 = vextract.high.u32 %v166
    %v169 = vmul.u32.u64.compose %v165, %v160
    %v170 = vextract.low.u32 %v169
    %v171 = vextract.high.u32 %v169
    %v172 = vmul.u32 %v165, %v156
    %v173 = vadd.s32 %v168, %v170
    %vm174 = vc.u32 %v168, %v170
    %v175 = vadd.s32 %v171, 1
    %v176 = vsel %vm174, %v175, %v171
    %v177 = vadd.s32 %v172, %v176
    %v178 = vadd.s32 %v177, 536870912
    %v179 = vshrl.u32 %v178, 30
    %v180 = vshll.u32 %v179, 30
    %v181 = vsub.s32 %v177, %v180
    %vm182 = vcmp.lt.s32.totalorder %v181, 0
    %v183 = vsub.s32 0, %v181
    %v184 = vsel %vm182, %v183, %v181
    %v185 = vclz %v184
    %v186 = vsub.s32 %v185, 2
    %vm187 = vcmp.gt.s32.totalorder 0, %v186
    %v188 = vsel %vm187, 0, %v186
    %v189 = vsub.s32 32, %v188
    %v190 = vshll.u32 %v181, %v188
    %v191 = vshrl.u32 %v173, %v189
    %v192 = vor.u32 %v190, %v191
    %v193 = vsub.s32 4294967266, %v188
    %v194 = vadd.s32 %v193, 127
    %v195 = vshll.u32 %v194, 23
    %v196 = vor.u32 4788187, %v195
    %v197 = vand.u32 2147483647, %v196
    %v199 = vcvt.s32.f32 %v192
    %v200 = vmul.f32 %v199, %v197
    %v201 = vxor.u32 %v200, 2147483648
    %v202 = vsel %vm119, %v201, %v200
    %v203 = vsub.s32 4, %v179
    %v204 = vsel %vm119, %v203, %v179
    %v205 = vsel %vm118, %v113, %v202
    %v206 = vsel %vm118, 0, %v204
    %v207 = vcosq.f32.pop %v205
    %v208 = vsinq.f32.pop %v205
    %vm209 = vweird.f32 %v113
    %v210 = vadd.s32 %v206, 3
    %v211 = vand.u32 %v210, 3
    %vm212 = vcmp.lt.s32.totalorder %v211, 2
    %vm213 = vcmp.eq.s32.totalorder %v211, 0
    %v214 = vxor.u32 %v208, 2147483648
    %v215 = vsel %vm213, %v207, %v214
    %vm216 = vcmp.eq.s32.totalorder %v211, 2
    %v217 = vxor.u32 %v207, 2147483648
    %v218 = vsel %vm216, %v217, %v208
    %v219 = vsel %vm212, %v215, %v218
    %v220 = vsel %vm209, nan, %v219
    %v221 = vand.u32 2147483647, %v113
    %vm222 = vcmp.le.f32.partialorder %v221, 0.7853982
    %vm223 = vcmp.lt.s32.totalorder %v113, 0
    %v224 = vand.u32 %v113, 2139095040
    %v225 = vshrl.u32 %v224, 23
    %v226 = vsub.s32 %v225, 127
    %v227 = vand.u32 2147483647, %v113
    %v228 = vand.u32 %v227, 8388607
    %v229 = vor.u32 %v228, 8388608
    %v230 = vsub.s32 0, %v229
    %v231 = vadd.s32 %v226, 1
    %vm232 = vcmp.gt.s32.totalorder %v231, 0
    %v233 = vsel %vm232, %v231, 0
    %v234 = vshrl.u32 %v233, 5
    %v235 = vand.u32 %v233, 31
    %v236 = vsub.s32 32, %v235
    %v237 = vshrl.u32 683565275, %v236
    %v238 = vshll.u32 683565275, %v235
    %v239 = vshrl.u32 2475754826, %v236
    %v240 = vor.u32 %v238, %v239
    %v241 = vshll.u32 2475754826, %v235
    %v242 = vshrl.u32 2131351028, %v236
    %v243 = vor.u32 %v241, %v242
    %v244 = vshll.u32 2131351028, %v235
    %v245 = vshrl.u32 2102212464, %v236
    %v246 = vor.u32 %v244, %v245
    %v247 = vshll.u32 2102212464, %v235
    %v248 = vshrl.u32 920167782, %v236
    %v249 = vor.u32 %v247, %v248
    %v250 = vshll.u32 920167782, %v235
    %v251 = vshrl.u32 1326507024, %v236
    %v252 = vor.u32 %v250, %v251
    %vm253 = vcmp.lt.s32.totalorder %v234, 1
    %vm254 = vcmp.lt.s32.totalorder %v234, 2
    %vm255 = vcmp.lt.s32.totalorder %v234, 3
    %vm256 = vcmp.lt.s32.totalorder %v234, 4
    %v257 = vsel %vm253, %v237, %v240
    %v258 = vsel %vm256, %v246, 2102212464
    %v259 = vsel %vm255, %v243, %v258
    %v260 = vsel %vm254, %v257, %v259
    %v261 = vsel %vm253, %v240, %v243
    %v262 = vsel %vm256, %v249, 920167782
    %v263 = vsel %vm255, %v246, %v262
    %v264 = vsel %vm254, %v261, %v263
    %v265 = vsel %vm253, %v243, %v246
    %v266 = vsel %vm256, %v252, 1326507024
    %v267 = vsel %vm255, %v249, %v266
    %v268 = vsel %vm254, %v265, %v267
    %v269 = vshll.u32 %v229, 8
    %v270 = vmul.u32.u64.compose %v269, %v268
    %v271 = vextract.low.u32 %v270
    %v272 = vextract.high.u32 %v270
    %v273 = vmul.u32.u64.compose %v269, %v264
    %v274 = vextract.low.u32 %v273
    %v275 = vextract.high.u32 %v273
    %v276 = vmul.u32 %v269, %v260
    %v277 = vadd.s32 %v272, %v274
    %vm278 = vc.u32 %v272, %v274
    %v279 = vadd.s32 %v275, 1
    %v280 = vsel %vm278, %v279, %v275
    %v281 = vadd.s32 %v276, %v280
    %v282 = vadd.s32 %v281, 536870912
    %v283 = vshrl.u32 %v282, 30
    %v284 = vshll.u32 %v283, 30
    %v285 = vsub.s32 %v281, %v284
    %vm286 = vcmp.lt.s32.totalorder %v285, 0
    %v287 = vsub.s32 0, %v285
    %v288 = vsel %vm286, %v287, %v285
    %v289 = vclz %v288
    %v290 = vsub.s32 %v289, 2
    %vm291 = vcmp.gt.s32.totalorder 0, %v290
    %v292 = vsel %vm291, 0, %v290
    %v293 = vsub.s32 32, %v292
    %v294 = vshll.u32 %v285, %v292
    %v295 = vshrl.u32 %v277, %v293
    %v296 = vor.u32 %v294, %v295
    %v297 = vsub.s32 4294967266, %v292
    %v298 = vadd.s32 %v297, 127
    %v299 = vshll.u32 %v298, 23
    %v300 = vor.u32 4788187, %v299
    %v301 = vand.u32 2147483647, %v300
    %v303 = vcvt.s32.f32 %v296
    %v304 = vmul.f32 %v303, %v301
    %v305 = vxor.u32 %v304, 2147483648
    %v306 = vsel %vm223, %v305, %v304
    %v307 = vsub.s32 4, %v283
    %v308 = vsel %vm223, %v307, %v283
    %v309 = vsel %vm222, %v113, %v306
    %v310 = vsel %vm222, 0, %v308
    %v311 = vcosq.f32.pop %v309
    %v312 = vsinq.f32.pop %v309
    %vm313 = vweird.f32 %v113
    %v314 = vand.u32 %v310, 3
    %vm315 = vcmp.lt.s32.totalorder %v314, 2
    %vm316 = vcmp.eq.s32.totalorder %v314, 0
    %v317 = vxor.u32 %v312, 2147483648
    %v318 = vsel %vm316, %v311, %v317
    %vm319 = vcmp.eq.s32.totalorder %v314, 2
    %v320 = vxor.u32 %v311, 2147483648
    %v321 = vsel %vm319, %v320, %v312
    %v322 = vsel %vm315, %v318, %v321
    %v323 = vsel %vm313, nan, %v322
    %v324 = vsel %vm116, %v220, %v323
    %v325 = vpack.c.bf16 %v324, %v324
    %v326 = vld [vmem:[#allocation6] sm:$0xf]
    %v327 = vld [vmem:[#allocation6 + $0x4] sm:$0xf]
    %v328 = vld [vmem:[#allocation6 + $0x8] sm:$0xf]
    %v329 = vld [vmem:[#allocation6 + $0xc] sm:$0xf]
    %v330 = vld [vmem:[#allocation6 + $0x10] sm:$0xf]
    %v331 = vld [vmem:[#allocation6 + $0x14] sm:$0xf]
    %v332 = vld [vmem:[#allocation6 + $0x18] sm:$0xf]
    %v333 = vld [vmem:[#allocation6 + $0x1c] sm:$0xf]
    %v334 = vld [vmem:[#allocation6 + $0x20] sm:$0xf]
    %v335 = vld [vmem:[#allocation6 + $0x24] sm:$0xf]
    %v336 = vld [vmem:[#allocation6 + $0x28] sm:$0xf]
    %v337 = vld [vmem:[#allocation6 + $0x2c] sm:$0xf]
    %v338 = vld [vmem:[#allocation6 + $0x30] sm:$0xf]
    %v339 = vld [vmem:[#allocation6 + $0x34] sm:$0xf]
    %v340 = vld [vmem:[#allocation6 + $0x38] sm:$0xf]
    %v341 = vld [vmem:[#allocation6 + $0x3c] sm:$0xf]
    %v358 = vunpack.c.l.b16 %v326
    %v359 = vunpack.c.l.b16 %v327
    %v360 = vunpack.c.l.b16 %v328
    %v361 = vunpack.c.l.b16 %v329
    %v362 = vunpack.c.l.b16 %v330
    %v363 = vunpack.c.l.b16 %v331
    %v364 = vunpack.c.l.b16 %v332
    %v365 = vunpack.c.l.b16 %v333
    %v366 = vunpack.c.l.b16 %v334
    %v367 = vunpack.c.l.b16 %v335
    %v368 = vunpack.c.l.b16 %v336
    %v369 = vunpack.c.l.b16 %v337
    %v370 = vunpack.c.l.b16 %v338
    %v371 = vunpack.c.l.b16 %v339
    %v372 = vunpack.c.l.b16 %v340
    %v373 = vunpack.c.l.b16 %v341
    %v374 = vpack.c.b16 %v359, %v358
    %v375 = vpack.c.b16 %v361, %v360
    %v376 = vpack.c.b16 %v363, %v362
    %v377 = vpack.c.b16 %v365, %v364
    %v378 = vpack.c.b16 %v367, %v366
    %v379 = vpack.c.b16 %v369, %v368
    %v380 = vpack.c.b16 %v371, %v370
    %v381 = vpack.c.b16 %v373, %v372
    %390 = vmatprep.subr.bf16.mxu0 0
    %391 = vmatpush1.bf16.msra.mxu0 %v381
    %392 = vmatprep.subr.bf16.mxu0 0
    %393 = vmatpush1.bf16.msra.mxu0 %v380
    %394 = vmatprep.subr.bf16.mxu0 0
    %395 = vmatpush1.bf16.msra.mxu0 %v379
    %396 = vmatprep.subr.bf16.mxu0 0
    %397 = vmatpush1.bf16.msra.mxu0 %v378
    %398 = vmatprep.subr.bf16.mxu0 0
    %399 = vmatpush1.bf16.msra.mxu0 %v377
    %400 = vmatprep.subr.bf16.mxu0 0
    %401 = vmatpush1.bf16.msra.mxu0 %v376
    %402 = vmatprep.subr.bf16.mxu0 0
    %403 = vmatpush1.bf16.msra.mxu0 %v375
    %404 = vmatprep.subr.bf16.mxu0 0
    %405 = vmatpush1.bf16.msra.mxu0 %v374
    %406 = vmatprep.subr.bf16.mxu0 0
    %407 = vmatpush2.bf16.msra.mxu0 0
    %408 = vmatprep.subr.bf16.mxu0 0
    %409 = vmatpush2.bf16.msra.mxu0 0
    %410 = vmatprep.subr.bf16.mxu0 0
    %411 = vmatpush2.bf16.msra.mxu0 0
    %412 = vmatprep.subr.bf16.mxu0 0
    %413 = vmatpush2.bf16.msra.mxu0 0
    %414 = vmatprep.subr.bf16.mxu0 0
    %415 = vmatpush2.bf16.msra.mxu0 0
    %416 = vmatprep.subr.bf16.mxu0 0
    %417 = vmatpush2.bf16.msra.mxu0 0
    %418 = vmatprep.subr.bf16.mxu0 0
    %419 = vmatpush2.bf16.msra.mxu0 0
    %420 = vmatprep.subr.bf16.mxu0 0
    %421 = vmatpush2.bf16.msra.mxu0 0
    %422 = vmatprep.mubr.bf16.mxu0 0
    %423 = vmatmul.mubr.bf16.gmra.mxu0 %v325
    %v424 = vpop.f32.mrf.mxu0
    %v425 = vadd.f32 0.0, %v424
    %v426 = vpop.f32.mrf.mxu0
    %v427 = vpop.f32.mrf.mxu0
    %v428 = vpop.f32.mrf.mxu0
    %429 = vdwg.mxu0
    %v430 = vmax.f32 %v425, 0.0
    %v431 = vpack.c.bf16 %v430, %v430
    %v432 = vld [vmem:[#allocation3] sm:$0xff]
    %v433 = vpack.c.bf16 %v432, %v432
    %v434 = vld [vmem:[%s4] sm:$0xf]
    %v435 = vld [vmem:[%s4 + $0x4] sm:$0xf]
    %v436 = vld [vmem:[%s4 + $0x8] sm:$0xf]
    %v437 = vld [vmem:[%s4 + $0xc] sm:$0xf]
    %v442 = vunpack.c.l.b16 %v434
    %v443 = vunpack.c.l.b16 %v435
    %v444 = vunpack.c.l.b16 %v436
    %v445 = vunpack.c.l.b16 %v437
    %v446 = vpack.c.b16 %v443, %v442
    %v447 = vpack.c.b16 %v445, %v444
    %vm450 = vcmask 261120
    %v452 = vsel %vm450, %v433, 0
    %454 = vmatprep.subr.bf16.mxu0 0
    %455 = vmatpush1.bf16.msra.mxu0 0
    %456 = vmatprep.subr.bf16.mxu0 0
    %457 = vmatpush1.bf16.msra.mxu0 0
    %458 = vmatprep.subr.bf16.mxu0 0
    %459 = vmatpush1.bf16.msra.mxu0 0
    %460 = vmatprep.subr.bf16.mxu0 0
    %461 = vmatpush1.bf16.msra.mxu0 0
    %462 = vmatprep.subr.bf16.mxu0 0
    %463 = vmatpush1.bf16.msra.mxu0 0
    %464 = vmatprep.subr.bf16.mxu0 0
    %465 = vmatpush1.bf16.msra.mxu0 0
    %466 = vmatprep.subr.bf16.mxu0 0
    %467 = vmatpush1.bf16.msra.mxu0 %v447
    %468 = vmatprep.subr.bf16.mxu0 0
    %469 = vmatpush1.bf16.msra.mxu0 %v446
    %470 = vmatprep.subr.bf16.mxu0 0
    %471 = vmatpush2.bf16.msra.mxu0 0
    %472 = vmatprep.subr.bf16.mxu0 0
    %473 = vmatpush2.bf16.msra.mxu0 0
    %474 = vmatprep.subr.bf16.mxu0 0
    %475 = vmatpush2.bf16.msra.mxu0 0
    %476 = vmatprep.subr.bf16.mxu0 0
    %477 = vmatpush2.bf16.msra.mxu0 0
    %478 = vmatprep.subr.bf16.mxu0 0
    %479 = vmatpush2.bf16.msra.mxu0 0
    %480 = vmatprep.subr.bf16.mxu0 0
    %481 = vmatpush2.bf16.msra.mxu0 0
    %482 = vmatprep.subr.bf16.mxu0 0
    %483 = vmatpush2.bf16.msra.mxu0 0
    %484 = vmatprep.subr.bf16.mxu0 0
    %485 = vmatpush2.bf16.msra.mxu0 0
    %486 = vmatprep.mubr.bf16.mxu0 0
    %487 = vmatmul.mubr.bf16.gmra.mxu0 %v452
    %v488 = vpop.f32.mrf.mxu0
    %v489 = vadd.f32 0.0, %v488
    %v490 = vpop.f32.mrf.mxu0
    %v491 = vpop.f32.mrf.mxu0
    %v492 = vpop.f32.mrf.mxu0
    %493 = vdwg.mxu0
    %v494 = vld [vmem:[#allocation9] sm:$0xff]
    %v495 = vld [vmem:[#allocation9 + $0x8] sm:$0xff]
    %v496 = vld [vmem:[#allocation9 + $0x10] sm:$0xff]
    %v497 = vld [vmem:[#allocation9 + $0x18] sm:$0xff]
    %v498 = vld [vmem:[#allocation9 + $0x20] sm:$0xff]
    %v499 = vld [vmem:[#allocation9 + $0x28] sm:$0xff]
    %v500 = vld [vmem:[#allocation9 + $0x30] sm:$0xff]
    %v501 = vld [vmem:[#allocation9 + $0x38] sm:$0xff]
    %v502 = vld [vmem:[#allocation9 + $0x40] sm:$0xff]
    %v503 = vld [vmem:[#allocation9 + $0x48] sm:$0xff]
    %v504 = vld [vmem:[#allocation9 + $0x50] sm:$0xff]
    %v505 = vld [vmem:[#allocation9 + $0x58] sm:$0xff]
    %v506 = vld [vmem:[#allocation9 + $0x60] sm:$0xff]
    %v507 = vld [vmem:[#allocation9 + $0x68] sm:$0xff]
    %v508 = vld [vmem:[#allocation9 + $0x70] sm:$0xff]
    %v509 = vld [vmem:[#allocation9 + $0x78] sm:$0xff]
    %v526 = vunpack.c.l.b16 %v494
    %v527 = vunpack.c.h.b16 %v494
    %v528 = vunpack.c.l.b16 %v495
    %v529 = vunpack.c.h.b16 %v495
    %v530 = vunpack.c.l.b16 %v496
    %v531 = vunpack.c.h.b16 %v496
    %v532 = vunpack.c.l.b16 %v497
    %v533 = vunpack.c.h.b16 %v497
    %v534 = vunpack.c.l.b16 %v498
    %v535 = vunpack.c.h.b16 %v498
    %v536 = vunpack.c.l.b16 %v499
    %v537 = vunpack.c.h.b16 %v499
    %v538 = vunpack.c.l.b16 %v500
    %v539 = vunpack.c.h.b16 %v500
    %v540 = vunpack.c.l.b16 %v501
    %v541 = vunpack.c.h.b16 %v501
    %v542 = vunpack.c.l.b16 %v502
    %v543 = vunpack.c.h.b16 %v502
    %v544 = vunpack.c.l.b16 %v503
    %v545 = vunpack.c.h.b16 %v503
    %v546 = vunpack.c.l.b16 %v504
    %v547 = vunpack.c.h.b16 %v504
    %v548 = vunpack.c.l.b16 %v505
    %v549 = vunpack.c.h.b16 %v505
    %v550 = vunpack.c.l.b16 %v506
    %v551 = vunpack.c.h.b16 %v506
    %v552 = vunpack.c.l.b16 %v507
    %v553 = vunpack.c.h.b16 %v507
    %v554 = vunpack.c.l.b16 %v508
    %v555 = vunpack.c.h.b16 %v508
    %v556 = vunpack.c.l.b16 %v509
    %v557 = vunpack.c.h.b16 %v509
    %v558 = vpack.c.b16 %v528, %v526
    %v559 = vpack.c.b16 %v529, %v527
    %v560 = vpack.c.b16 %v532, %v530
    %v561 = vpack.c.b16 %v533, %v531
    %v562 = vpack.c.b16 %v536, %v534
    %v563 = vpack.c.b16 %v537, %v535
    %v564 = vpack.c.b16 %v540, %v538
    %v565 = vpack.c.b16 %v541, %v539
    %v566 = vpack.c.b16 %v544, %v542
    %v567 = vpack.c.b16 %v545, %v543
    %v568 = vpack.c.b16 %v548, %v546
    %v569 = vpack.c.b16 %v549, %v547
    %v570 = vpack.c.b16 %v552, %v550
    %v571 = vpack.c.b16 %v553, %v551
    %v572 = vpack.c.b16 %v556, %v554
    %v573 = vpack.c.b16 %v557, %v555
    %590 = vmatprep.subr.bf16.mxu0 %v573
    %591 = vmatpush1.bf16.msra.mxu0 %v572
    %592 = vmatprep.subr.bf16.mxu0 %v571
    %593 = vmatpush1.bf16.msra.mxu0 %v570
    %594 = vmatprep.subr.bf16.mxu0 %v569
    %595 = vmatpush1.bf16.msra.mxu0 %v568
    %596 = vmatprep.subr.bf16.mxu0 %v567
    %597 = vmatpush1.bf16.msra.mxu0 %v566
    %598 = vmatprep.subr.bf16.mxu0 %v565
    %599 = vmatpush1.bf16.msra.mxu0 %v564
    %600 = vmatprep.subr.bf16.mxu0 %v563
    %601 = vmatpush1.bf16.msra.mxu0 %v562
    %602 = vmatprep.subr.bf16.mxu0 %v561
    %603 = vmatpush1.bf16.msra.mxu0 %v560
    %604 = vmatprep.subr.bf16.mxu0 %v559
    %605 = vmatpush1.bf16.msra.mxu0 %v558
    %606 = vmatprep.subr.bf16.mxu0 0
    %607 = vmatpush2.bf16.msra.mxu0 0
    %608 = vmatprep.subr.bf16.mxu0 0
    %609 = vmatpush2.bf16.msra.mxu0 0
    %610 = vmatprep.subr.bf16.mxu0 0
    %611 = vmatpush2.bf16.msra.mxu0 0
    %612 = vmatprep.subr.bf16.mxu0 0
    %613 = vmatpush2.bf16.msra.mxu0 0
    %614 = vmatprep.subr.bf16.mxu0 0
    %615 = vmatpush2.bf16.msra.mxu0 0
    %616 = vmatprep.subr.bf16.mxu0 0
    %617 = vmatpush2.bf16.msra.mxu0 0
    %618 = vmatprep.subr.bf16.mxu0 0
    %619 = vmatpush2.bf16.msra.mxu0 0
    %620 = vmatprep.subr.bf16.mxu0 0
    %621 = vmatpush2.bf16.msra.mxu0 0
    %622 = vmatprep.mubr.bf16.mxu0 0
    %623 = vmatmul.mubr.bf16.gmra.mxu0 %v431
    %v624 = vpop.f32.mrf.mxu0
    %v625 = vadd.f32 0.0, %v624
    %v626 = vpop.f32.mrf.mxu0
    %v627 = vadd.f32 0.0, %v626
    %v628 = vpop.f32.mrf.mxu0
    %v629 = vpop.f32.mrf.mxu0
    %630 = vdwg.mxu0
    %631 = vst [vmem:[#allocation2] sm:$0xff] %v625
    %632 = vst [vmem:[#allocation2 + $0x8] sm:$0xff] %v627
    %v633 = vpack.c.bf16 %v489, %v489
    %v634 = vld [vmem:[#allocation8] sm:$0xf]
    %v635 = vld [vmem:[#allocation8 + $0x4] sm:$0xf]
    %v636 = vld [vmem:[#allocation8 + $0x8] sm:$0xf]
    %v637 = vld [vmem:[#allocation8 + $0xc] sm:$0xf]
    %v638 = vld [vmem:[#allocation8 + $0x10] sm:$0xf]
    %v639 = vld [vmem:[#allocation8 + $0x14] sm:$0xf]
    %v640 = vld [vmem:[#allocation8 + $0x18] sm:$0xf]
    %v641 = vld [vmem:[#allocation8 + $0x1c] sm:$0xf]
    %v642 = vld [vmem:[#allocation8 + $0x20] sm:$0xf]
    %v643 = vld [vmem:[#allocation8 + $0x24] sm:$0xf]
    %v644 = vld [vmem:[#allocation8 + $0x28] sm:$0xf]
    %v645 = vld [vmem:[#allocation8 + $0x2c] sm:$0xf]
    %v646 = vld [vmem:[#allocation8 + $0x30] sm:$0xf]
    %v647 = vld [vmem:[#allocation8 + $0x34] sm:$0xf]
    %v648 = vld [vmem:[#allocation8 + $0x38] sm:$0xf]
    %v649 = vld [vmem:[#allocation8 + $0x3c] sm:$0xf]
    %v650 = vld [vmem:[#allocation2] sm:$0xff]
    %v667 = vunpack.c.l.b16 %v634
    %v668 = vunpack.c.l.b16 %v635
    %v669 = vunpack.c.l.b16 %v636
    %v670 = vunpack.c.l.b16 %v637
    %v671 = vunpack.c.l.b16 %v638
    %v672 = vunpack.c.l.b16 %v639
    %v673 = vunpack.c.l.b16 %v640
    %v674 = vunpack.c.l.b16 %v641
    %v675 = vunpack.c.l.b16 %v642
    %v676 = vunpack.c.l.b16 %v643
    %v677 = vunpack.c.l.b16 %v644
    %v678 = vunpack.c.l.b16 %v645
    %v679 = vunpack.c.l.b16 %v646
    %v680 = vunpack.c.l.b16 %v647
    %v681 = vunpack.c.l.b16 %v648
    %v682 = vunpack.c.l.b16 %v649
    %v683 = vpack.c.b16 %v668, %v667
    %v684 = vpack.c.b16 %v670, %v669
    %v685 = vpack.c.b16 %v672, %v671
    %v686 = vpack.c.b16 %v674, %v673
    %v687 = vpack.c.b16 %v676, %v675
    %v688 = vpack.c.b16 %v678, %v677
    %v689 = vpack.c.b16 %v680, %v679
    %v690 = vpack.c.b16 %v682, %v681
    %699 = vmatprep.subr.bf16.mxu0 0
    %700 = vmatpush1.bf16.msra.mxu0 %v690
    %701 = vmatprep.subr.bf16.mxu0 0
    %702 = vmatpush1.bf16.msra.mxu0 %v689
    %703 = vmatprep.subr.bf16.mxu0 0
    %704 = vmatpush1.bf16.msra.mxu0 %v688
    %705 = vmatprep.subr.bf16.mxu0 0
    %706 = vmatpush1.bf16.msra.mxu0 %v687
    %707 = vmatprep.subr.bf16.mxu0 0
    %708 = vmatpush1.bf16.msra.mxu0 %v686
    %709 = vmatprep.subr.bf16.mxu0 0
    %710 = vmatpush1.bf16.msra.mxu0 %v685
    %711 = vmatprep.subr.bf16.mxu0 0
    %712 = vmatpush1.bf16.msra.mxu0 %v684
    %713 = vmatprep.subr.bf16.mxu0 0
    %714 = vmatpush1.bf16.msra.mxu0 %v683
    %715 = vmatprep.subr.bf16.mxu0 0
    %716 = vmatpush2.bf16.msra.mxu0 0
    %717 = vmatprep.subr.bf16.mxu0 0
    %718 = vmatpush2.bf16.msra.mxu0 0
    %719 = vmatprep.subr.bf16.mxu0 0
    %720 = vmatpush2.bf16.msra.mxu0 0
    %721 = vmatprep.subr.bf16.mxu0 0
    %722 = vmatpush2.bf16.msra.mxu0 0
    %723 = vmatprep.subr.bf16.mxu0 0
    %724 = vmatpush2.bf16.msra.mxu0 0
    %725 = vmatprep.subr.bf16.mxu0 0
    %726 = vmatpush2.bf16.msra.mxu0 0
    %727 = vmatprep.subr.bf16.mxu0 0
    %728 = vmatpush2.bf16.msra.mxu0 0
    %729 = vmatprep.subr.bf16.mxu0 0
    %730 = vmatpush2.bf16.msra.mxu0 0
    %731 = vmatprep.mubr.bf16.mxu0 0
    %732 = vmatmul.mubr.bf16.gmra.mxu0 %v633
    %v733 = vpop.f32.mrf.mxu0
    %v734 = vadd.f32 %v650, %v733
    %v735 = vpop.f32.mrf.mxu0
    %v736 = vpop.f32.mrf.mxu0
    %v737 = vpop.f32.mrf.mxu0
    %738 = vdwg.mxu0
    %v739 = vmax.f32 %v734, 0.0
    %v740 = vadd.f32 %v489, %v739
    %v741 = vpack.c.bf16 %v740, %v740
    %s742 = scalar_lea.vmem [#allocation8], 64
    %v743 = vld [vmem:[%s742] sm:$0xf]
    %v744 = vld [vmem:[%s742 + $0x4] sm:$0xf]
    %v745 = vld [vmem:[%s742 + $0x8] sm:$0xf]
    %v746 = vld [vmem:[%s742 + $0xc] sm:$0xf]
    %v747 = vld [vmem:[%s742 + $0x10] sm:$0xf]
    %v748 = vld [vmem:[%s742 + $0x14] sm:$0xf]
    %v749 = vld [vmem:[%s742 + $0x18] sm:$0xf]
    %v750 = vld [vmem:[%s742 + $0x1c] sm:$0xf]
    %v751 = vld [vmem:[%s742 + $0x20] sm:$0xf]
    %v752 = vld [vmem:[%s742 + $0x24] sm:$0xf]
    %v753 = vld [vmem:[%s742 + $0x28] sm:$0xf]
    %v754 = vld [vmem:[%s742 + $0x2c] sm:$0xf]
    %v755 = vld [vmem:[%s742 + $0x30] sm:$0xf]
    %v756 = vld [vmem:[%s742 + $0x34] sm:$0xf]
    %v757 = vld [vmem:[%s742 + $0x38] sm:$0xf]
    %v758 = vld [vmem:[%s742 + $0x3c] sm:$0xf]
    %v759 = vld [vmem:[#allocation2 + $0x8] sm:$0xff]
    %v776 = vunpack.c.l.b16 %v743
    %v777 = vunpack.c.l.b16 %v744
    %v778 = vunpack.c.l.b16 %v745
    %v779 = vunpack.c.l.b16 %v746
    %v780 = vunpack.c.l.b16 %v747
    %v781 = vunpack.c.l.b16 %v748
    %v782 = vunpack.c.l.b16 %v749
    %v783 = vunpack.c.l.b16 %v750
    %v784 = vunpack.c.l.b16 %v751
    %v785 = vunpack.c.l.b16 %v752
    %v786 = vunpack.c.l.b16 %v753
    %v787 = vunpack.c.l.b16 %v754
    %v788 = vunpack.c.l.b16 %v755
    %v789 = vunpack.c.l.b16 %v756
    %v790 = vunpack.c.l.b16 %v757
    %v791 = vunpack.c.l.b16 %v758
    %v792 = vpack.c.b16 %v777, %v776
    %v793 = vpack.c.b16 %v779, %v778
    %v794 = vpack.c.b16 %v781, %v780
    %v795 = vpack.c.b16 %v783, %v782
    %v796 = vpack.c.b16 %v785, %v784
    %v797 = vpack.c.b16 %v787, %v786
    %v798 = vpack.c.b16 %v789, %v788
    %v799 = vpack.c.b16 %v791, %v790
    %808 = vmatprep.subr.bf16.mxu0 0
    %809 = vmatpush1.bf16.msra.mxu0 %v799
    %810 = vmatprep.subr.bf16.mxu0 0
    %811 = vmatpush1.bf16.msra.mxu0 %v798
    %812 = vmatprep.subr.bf16.mxu0 0
    %813 = vmatpush1.bf16.msra.mxu0 %v797
    %814 = vmatprep.subr.bf16.mxu0 0
    %815 = vmatpush1.bf16.msra.mxu0 %v796
    %816 = vmatprep.subr.bf16.mxu0 0
    %817 = vmatpush1.bf16.msra.mxu0 %v795
    %818 = vmatprep.subr.bf16.mxu0 0
    %819 = vmatpush1.bf16.msra.mxu0 %v794
    %820 = vmatprep.subr.bf16.mxu0 0
    %821 = vmatpush1.bf16.msra.mxu0 %v793
    %822 = vmatprep.subr.bf16.mxu0 0
    %823 = vmatpush1.bf16.msra.mxu0 %v792
    %824 = vmatprep.subr.bf16.mxu0 0
    %825 = vmatpush2.bf16.msra.mxu0 0
    %826 = vmatprep.subr.bf16.mxu0 0
    %827 = vmatpush2.bf16.msra.mxu0 0
    %828 = vmatprep.subr.bf16.mxu0 0
    %829 = vmatpush2.bf16.msra.mxu0 0
    %830 = vmatprep.subr.bf16.mxu0 0
    %831 = vmatpush2.bf16.msra.mxu0 0
    %832 = vmatprep.subr.bf16.mxu0 0
    %833 = vmatpush2.bf16.msra.mxu0 0
    %834 = vmatprep.subr.bf16.mxu0 0
    %835 = vmatpush2.bf16.msra.mxu0 0
    %836 = vmatprep.subr.bf16.mxu0 0
    %837 = vmatpush2.bf16.msra.mxu0 0
    %838 = vmatprep.subr.bf16.mxu0 0
    %839 = vmatpush2.bf16.msra.mxu0 0
    %840 = vmatprep.mubr.bf16.mxu0 0
    %841 = vmatmul.mubr.bf16.gmra.mxu0 %v741
    %v842 = vpop.f32.mrf.mxu0
    %v843 = vadd.f32 %v759, %v842
    %v844 = vpop.f32.mrf.mxu0
    %v845 = vpop.f32.mrf.mxu0
    %v846 = vpop.f32.mrf.mxu0
    %847 = vdwg.mxu0
    %v848 = vmax.f32 %v843, 0.0
    %v849 = vadd.f32 %v740, %v848
    %v850 = vpack.c.bf16 %v849, %v849
    %v851 = vld [vmem:[#allocation11] sm:$0xf]
    %v852 = vld [vmem:[#allocation11 + $0x4] sm:$0xf]
    %v853 = vld [vmem:[#allocation11 + $0x8] sm:$0xf]
    %v854 = vld [vmem:[#allocation11 + $0xc] sm:$0xf]
    %v855 = vld [vmem:[#allocation11 + $0x10] sm:$0xf]
    %v856 = vld [vmem:[#allocation11 + $0x14] sm:$0xf]
    %v857 = vld [vmem:[#allocation11 + $0x18] sm:$0xf]
    %v858 = vld [vmem:[#allocation11 + $0x1c] sm:$0xf]
    %v859 = vld [vmem:[#allocation11 + $0x20] sm:$0xf]
    %v860 = vld [vmem:[#allocation11 + $0x24] sm:$0xf]
    %v861 = vld [vmem:[#allocation11 + $0x28] sm:$0xf]
    %v862 = vld [vmem:[#allocation11 + $0x2c] sm:$0xf]
    %v863 = vld [vmem:[#allocation11 + $0x30] sm:$0xf]
    %v864 = vld [vmem:[#allocation11 + $0x34] sm:$0xf]
    %v865 = vld [vmem:[#allocation11 + $0x38] sm:$0xf]
    %v866 = vld [vmem:[#allocation11 + $0x3c] sm:$0xf]
    %v867 = vld [vmem:[%s8] sm:$0x1]
    %v869 = vlaneseq
    %v870 = vshrl.u32 %v869, 7
    %v871 = vsub.s32 0, %v870
    %v872 = vrot.slane %v867, %v871
    %v890 = vunpack.c.l.b16 %v851
    %v891 = vunpack.c.l.b16 %v852
    %v892 = vunpack.c.l.b16 %v853
    %v893 = vunpack.c.l.b16 %v854
    %v894 = vunpack.c.l.b16 %v855
    %v895 = vunpack.c.l.b16 %v856
    %v896 = vunpack.c.l.b16 %v857
    %v897 = vunpack.c.l.b16 %v858
    %v898 = vunpack.c.l.b16 %v859
    %v899 = vunpack.c.l.b16 %v860
    %v900 = vunpack.c.l.b16 %v861
    %v901 = vunpack.c.l.b16 %v862
    %v902 = vunpack.c.l.b16 %v863
    %v903 = vunpack.c.l.b16 %v864
    %v904 = vunpack.c.l.b16 %v865
    %v905 = vunpack.c.l.b16 %v866
    %v906 = vpack.c.b16 %v891, %v890
    %v907 = vpack.c.b16 %v893, %v892
    %v908 = vpack.c.b16 %v895, %v894
    %v909 = vpack.c.b16 %v897, %v896
    %v910 = vpack.c.b16 %v899, %v898
    %v911 = vpack.c.b16 %v901, %v900
    %v912 = vpack.c.b16 %v903, %v902
    %v913 = vpack.c.b16 %v905, %v904
    %922 = vmatprep.subr.bf16.mxu0 0
    %923 = vmatpush1.bf16.msra.mxu0 %v913
    %924 = vmatprep.subr.bf16.mxu0 0
    %925 = vmatpush1.bf16.msra.mxu0 %v912
    %926 = vmatprep.subr.bf16.mxu0 0
    %927 = vmatpush1.bf16.msra.mxu0 %v911
    %928 = vmatprep.subr.bf16.mxu0 0
    %929 = vmatpush1.bf16.msra.mxu0 %v910
    %930 = vmatprep.subr.bf16.mxu0 0
    %931 = vmatpush1.bf16.msra.mxu0 %v909
    %932 = vmatprep.subr.bf16.mxu0 0
    %933 = vmatpush1.bf16.msra.mxu0 %v908
    %934 = vmatprep.subr.bf16.mxu0 0
    %935 = vmatpush1.bf16.msra.mxu0 %v907
    %936 = vmatprep.subr.bf16.mxu0 0
    %937 = vmatpush1.bf16.msra.mxu0 %v906
    %938 = vmatprep.subr.bf16.mxu0 0
    %939 = vmatpush2.bf16.msra.mxu0 0
    %940 = vmatprep.subr.bf16.mxu0 0
    %941 = vmatpush2.bf16.msra.mxu0 0
    %942 = vmatprep.subr.bf16.mxu0 0
    %943 = vmatpush2.bf16.msra.mxu0 0
    %944 = vmatprep.subr.bf16.mxu0 0
    %945 = vmatpush2.bf16.msra.mxu0 0
    %946 = vmatprep.subr.bf16.mxu0 0
    %947 = vmatpush2.bf16.msra.mxu0 0
    %948 = vmatprep.subr.bf16.mxu0 0
    %949 = vmatpush2.bf16.msra.mxu0 0
    %950 = vmatprep.subr.bf16.mxu0 0
    %951 = vmatpush2.bf16.msra.mxu0 0
    %952 = vmatprep.subr.bf16.mxu0 0
    %953 = vmatpush2.bf16.msra.mxu0 0
    %954 = vmatprep.mubr.bf16.mxu0 0
    %955 = vmatmul.mubr.bf16.gmra.mxu0 %v850
    %v956 = vpop.f32.mrf.mxu0
    %v957 = vadd.f32 %v872, %v956
    %v958 = vpop.f32.mrf.mxu0
    %v959 = vpop.f32.mrf.mxu0
    %v960 = vpop.f32.mrf.mxu0
    %961 = vdwg.mxu0
    %962 = vst [vmem:[#allocation12] sm:$0xff] %v957
    // Predicated region
    $region58: #{decoder_forward.1} parent=1 // pred_check
      _
    $region59: #{decoder_forward.1} parent=1 // pred_check_branch
      %964 = sbr.rel (0) target = $region61
    $region60: #{decoder_forward.1} parent=1 // pred_region
      %s966 = ssub.s32 128, 128
      %967 = vsyncadd [#allocation5], %s966
      %s969 = sshll.u32 [#allocation12], 4
      %s970 = int_to_ptr.vmem [resolvable:$true] %s969
      %972 = dma.vmem_to_hbm [thread:$0]  %s970, 128, %s9, [#allocation5]
    $region61: #{decoder_forward.1} parent=1 // pred_fallthru
      _
    // Predicated region
    $region62: #{decoder_forward.1} parent=1 // pred_check
      _
    $region63: #{decoder_forward.1} parent=1 // pred_check_branch
      %974 = sbr.rel (0) target = $region65
    $region64: #{decoder_forward.1} parent=1 // pred_region
      %975 = dma.done [#allocation5], 128
    $region65: #{decoder_forward.1} parent=1 // pred_fallthru
      _
    %976 = vsyncpa [#allocation4], 1
    %977 = vsyncpa [#allocation7], 1
    %978 = vsyncpa [#allocation10], 1
    %979 = vsyncpa [#allocation5], 1

</llo_original>
